<compile_context>
chip_gen: v5e
topology: v5e:2x2
jax: 0.10.0
libtpu: 0.0.40
codegen_flags: <defaults>
</compile_context>

<pallas_src>
import functools

import jax
import jax.numpy as jnp
import numpy as np
from jax.experimental import pallas as pl
from jax.experimental.pallas import tpu as pltpu


def _round_up(v, m):
    return ((v + m - 1) // m) * m


def _vmem_bytes(shape, dtype):
    """Rough VMEM footprint of one buffer (pads the trailing (sublane, lane) dims)."""
    itemsize = jnp.dtype(dtype).itemsize
    dims = list(shape)
    dims[-1] = _round_up(dims[-1], 128)
    if len(dims) >= 2:
        dims[-2] = _round_up(dims[-2], 8 * (4 // itemsize))
    return int(np.prod(dims)) * itemsize


# ------------------------------ Pallas kernel ------------------------------- #
def _gin_kernel(w_ref, s_ref, x_ref, o_ref, patch_ref, *,
                k, nc, nzp, w_out, tj, ck, ck_pad, use_act):
    # w_ref:     (1, OC, CK_pad)        bf16, columns ordered (dx, dy, dz, ci)
    # s_ref:     (1, OC, 1)             f32 shift
    # x_ref:     (1, nxp, nc, w_in)     bf16 padded input, yz flattened (row stride nzp)
    # o_ref:     (1, TJ, OC, w_out)     f32 output rows jb*TJ .. jb*TJ + TJ - 1
    # patch_ref: (CK_pad, TJ*w_out)     bf16 VMEM scratch (in-kernel im2col)
    jb = pl.program_id(1)

    # Zero the contraction pad rows once per batch; the scratch persists across
    # the inner grid axis and every real row is rewritten below each step.
    if ck_pad > ck:
        @pl.when(jb == 0)
        def _():
            patch_ref[pl.ds(ck, ck_pad - ck), :] = jnp.zeros(
                (ck_pad - ck, tj * w_out), patch_ref.dtype)

    # In-kernel im2col: each padded input x-row is loaded ONCE and its k^2
    # statically-shifted lane slices are scattered to every (output-row, dx)
    # patch position that consumes it.  The k^3-inflated patch never leaves VMEM.
    for r in range(tj + k - 1):
        slab = x_ref[0, jb * tj + r]                       # (nc, w_in) bf16
        for dy in range(k):
            for dz in range(k):
                off = dy * nzp + dz                        # static lane offset
                piece = slab[:, off:off + w_out]           # (nc, w_out)
                for dx in range(k):
                    t = r - dx
                    if 0 <= t < tj:
                        r0 = ((dx * k + dy) * k + dz) * nc
                        patch_ref[pl.ds(r0, nc),
                                  pl.ds(t * w_out, w_out)] = piece
    # TODO(synk): pack these (nc, w_out) pieces into full 16-row bf16 sublane
    # tiles (unaligned sublane concat) to further relieve the vst slot.

    # One wide MXU matmul per grid step (bf16 operands, f32 accumulate).
    acc = jnp.dot(w_ref[0], patch_ref[...],
                  preferred_element_type=jnp.float32)      # (OC, TJ*w_out)

    # Chunked epilogue: per output row so live f32 vregs stay small and every
    # store is a full lane-dense (OC, w_out) tile.
    for t in range(tj):
        a = acc[:, t * w_out:(t + 1) * w_out] + s_ref[0]   # bias in f32
        if use_act:
            a = jnp.maximum(a, 0.01 * a)                   # leaky_relu(0.01)
        o_ref[0, t] = a.astype(o_ref.dtype)


# -------------------------------- wrapper ---------------------------------- #
@functools.partial(jax.jit, static_argnames=("k", "use_act"))
def gin_gc_replay_block_3d(x, ker, shift, *, k, use_act=True):
    """Forward pass of GradlessGCReplayNonlinBlock3D.

    x:     (nb, nc, nx, ny, nz)            float32
    ker:   (out_channel*nb, nc, k, k, k)   float32
    shift: (out_channel*nb, 1, 1, 1)       float32
    """
    nb, nc, nx, ny, nz = x.shape
    oc = ker.shape[0] // nb
    p = k // 2
    nzp, nyp = nz + 2 * p, ny + 2 * p

    w_valid = ny * nzp                      # flat yz width holding all valid outputs
    w_out = _round_up(w_valid, 128)         # lane-dense output tile width
    tj = max(1, min(8, 512 // w_out))       # x-rows per grid step (matmul N ~ 512)
    tj = min(tj, max(1, nx))
    nx_pad = _round_up(nx, tj)
    nxp = nx_pad + 2 * p
    w_in = 2 * p * nzp + 2 * p + w_out      # keeps every shifted lane slice in-bounds

    ck = nc * k ** 3
    ck_pad = _round_up(ck, 16)              # bf16 sublane tile

    # ---- input layout (bf16 first so every wrapper pass moves half the bytes) ----
    xb = x.astype(jnp.bfloat16)
    xb = jnp.pad(xb, ((0, 0), (0, 0), (p, p + nx_pad - nx), (p, p), (p, p)))
    x_in = xb.transpose(0, 2, 1, 3, 4).reshape(nb, nxp, nc, nyp * nzp)
    x_in = jnp.pad(x_in, ((0, 0), (0, 0), (0, 0), (0, w_in - nyp * nzp)))
    # TODO(synk): fold the spatial halo padding into the kernel (boundary masks)
    # so x needs a single wrapper-side layout pass.

    # weight columns ordered (dx, dy, dz, ci) to match in-kernel patch rows
    w_flat = (ker.reshape(nb, oc, nc, k, k, k)
                 .transpose(0, 1, 3, 4, 5, 2)
                 .reshape(nb, oc, ck))
    if ck_pad > ck:
        w_flat = jnp.pad(w_flat, ((0, 0), (0, 0), (0, ck_pad - ck)))
    w_flat = w_flat.astype(jnp.bfloat16)
    shift_b = shift.reshape(nb, oc, 1).astype(jnp.float32)

    kern = functools.partial(_gin_kernel, k=k, nc=nc, nzp=nzp, w_out=w_out,
                             tj=tj, ck=ck, ck_pad=ck_pad, use_act=use_act)

    in_specs = [
        pl.BlockSpec((1, oc, ck_pad), lambda b, j: (b, 0, 0)),
        pl.BlockSpec((1, oc, 1), lambda b, j: (b, 0, 0)),
        pl.BlockSpec((1, nxp, nc, w_in), lambda b, j: (b, 0, 0, 0)),
    ]
    out_specs = pl.BlockSpec((1, tj, oc, w_out), lambda b, j: (b, j, 0, 0))
    out_shape = jax.ShapeDtypeStruct((nb, nx_pad, oc, w_out), jnp.float32)
    scratch_shapes = [pltpu.VMEM((ck_pad, tj * w_out), jnp.bfloat16)]

    # ---- generation-aware VMEM budget ----
    vmem_need = (2 * (_vmem_bytes((oc, ck_pad), jnp.bfloat16)
                      + _vmem_bytes((oc, 1), jnp.float32)
                      + _vmem_bytes((nxp, nc, w_in), jnp.bfloat16)
                      + _vmem_bytes((tj, oc, w_out), jnp.float32))
                 + _vmem_bytes((ck_pad, tj * w_out), jnp.bfloat16))
    try:
        vmem_cap = int(pltpu.get_tpu_info().vmem_capacity_bytes)
    except Exception:
        vmem_cap = 128 << 20
    # leave ~25% physical headroom: ~96 MiB usable on v5e/v6e, ~48 MiB on v7x
    vmem_limit = int(min(max(vmem_need + (8 << 20), 32 << 20), (vmem_cap * 3) // 4))
    # TODO(synk): for very large ny*nz add a third grid axis tiling w_out and
    # single-buffer the batch-resident x slab so it fits v7x's 64 MiB VMEM.

    out = pl.pallas_call(
        kern,
        out_shape=out_shape,
        grid=(nb, nx_pad // tj),
        in_specs=in_specs,
        out_specs=out_specs,
        scratch_shapes=scratch_shapes,
        compiler_params=pltpu.CompilerParams(
            dimension_semantics=("parallel", "arbitrary"),
            vmem_limit_bytes=vmem_limit),
    )(w_flat, shift_b, x_in)

    # drop pad rows / gap columns and restore (nb, oc, nx, ny, nz)
    out = out[:, :nx, :, :ny * nzp].reshape(nb, nx, oc, ny, nzp)[..., :nz]
    return out.transpose(0, 2, 1, 3, 4)


# ------------------------------ pure-JAX ref -------------------------------- #
def _reference(x, ker, shift, k, out_channel, use_act=True):
    nb, nc, nx, ny, nz = x.shape
    p = k // 2
    xr = x.reshape(1, nb * nc, nx, ny, nz)
    y = jax.lax.conv_general_dilated(
        xr, ker,
        window_strides=(1, 1, 1),
        padding=[(p, p)] * 3,
        dimension_numbers=("NCDHW", "OIDHW", "NCDHW"),
        feature_group_count=nb,
        precision=jax.lax.Precision.HIGHEST)
    y = y + shift.reshape(1, -1, 1, 1, 1)
    if use_act:
        y = jnp.where(y > 0, y, 0.01 * y)
    return y.reshape(nb, out_channel, nx, ny, nz)


# ---------------------------------- main ------------------------------------ #
if __name__ == "__main__":
    key = jax.random.PRNGKey(0)
    nb, in_channel, out_channel = 2, 3, 32
    nx = ny = nz = 8
    scale_pool = [1, 3]
    # TODO(synk): the torch.randint(k) / torch.randn(ker, shift) draws stay
    # host-side RNG (as in the PyTorch forward()); they are plain kernel inputs.

    x_key, key = jax.random.split(key)
    x = jax.random.normal(x_key, (nb, in_channel, nx, ny, nz), dtype=jnp.float32)

    # exercise both scale_pool branches (k=1 and k=3) through the same kernel
    for k in scale_pool:
        ker_key, shift_key, key = jax.random.split(key, 3)
        ker = jax.random.normal(
            ker_key, (out_channel * nb, in_channel, k, k, k), dtype=jnp.float32)
        shift = jax.random.normal(
            shift_key, (out_channel * nb, 1, 1, 1), dtype=jnp.float32) * 1.0

        out = gin_gc_replay_block_3d(x, ker, shift, k=k, use_act=True)
        out = jax.block_until_ready(out)
        assert out.shape == (nb, out_channel, nx, ny, nz)

        # kernel feeds the MXU bf16 operands (f32 accumulate); compare against
        # the reference evaluated on bf16-rounded inputs.
        xq = x.astype(jnp.bfloat16).astype(jnp.float32)
        kq = ker.astype(jnp.bfloat16).astype(jnp.float32)
        ref = _reference(xq, kq, shift, k, out_channel, use_act=True)
        np.testing.assert_allclose(np.asarray(out), np.asarray(ref),
                                   rtol=1e-2, atol=1e-2)

    print("KERNEL_OK")
</pallas_src>

<mosaic_0001>
module attributes {stable_mosaic.version = 11 : i64} {
  func.func @_gin_kernel(%arg0: i32, %arg1: i32, %arg2: memref<1x32x16xbf16, #tpu.memory_space<vmem>>, %arg3: memref<1x32x1xf32, #tpu.memory_space<vmem>>, %arg4: memref<1x8x3x128xbf16, #tpu.memory_space<vmem>>, %arg5: memref<1x4x32x128xf32, #tpu.memory_space<vmem>>, %arg6: memref<16x512xbf16, #tpu.memory_space<vmem>>) attributes {dimension_semantics = [#tpu.dimension_semantics<parallel>, #tpu.dimension_semantics<arbitrary>], iteration_bounds = array<i64: 2, 2>, scalar_prefetch = 0 : i64, scratch_operands = 1 : i64, tpu.core_type = #tpu.core_type<tc>, window_params = [{transform_indices = @transform_0, window_bounds = array<i64: 1, 32, 16>}, {transform_indices = @transform_1, window_bounds = array<i64: 1, 32, 1>}, {transform_indices = @transform_2, window_bounds = array<i64: 1, 8, 3, 128>}, {transform_indices = @transform_3, window_bounds = array<i64: 1, 4, 32, 128>}]} {
    %c0_i32 = arith.constant 0 : i32
    %0 = arith.cmpi eq, %arg1, %c0_i32 : i32
    %1 = arith.extui %0 : i1 to i32
    %c0_i32_0 = arith.constant 0 : i32
    %2 = arith.cmpi ne, %1, %c0_i32_0 : i32
    scf.if %2 {
      %cst_55 = arith.constant 0.000000e+00 : bf16
      %75 = vector.broadcast %cst_55 : bf16 to vector<13x512xbf16>
      %c3_56 = arith.constant 3 : index
      %c0_57 = arith.constant 0 : index
      %76 = vector.load %arg6[%c3_56, %c0_57] : memref<16x512xbf16, #tpu.memory_space<vmem>>, vector<13x512xbf16>
      tpu.vector_store %arg6[%c3_56, %c0_57], %75 {strides = array<i32>} : memref<16x512xbf16, #tpu.memory_space<vmem>>, vector<13x512xbf16>,
    } else {
    }
    %c4_i32 = arith.constant 4 : i32
    %3 = arith.muli %arg1, %c4_i32 : i32
    %c0_i32_1 = arith.constant 0 : i32
    %4 = arith.addi %3, %c0_i32_1 : i32
    %c0 = arith.constant 0 : index
    %5 = arith.index_cast %4 : i32 to index
    %c0_2 = arith.constant 0 : index
    %c0_3 = arith.constant 0 : index
    %6 = vector.load %arg4[%c0, %5, %c0_2, %c0_3] : memref<1x8x3x128xbf16, #tpu.memory_space<vmem>>, vector<1x1x3x128xbf16>
    %7 = vector.shape_cast %6 : vector<1x1x3x128xbf16> to vector<3x128xbf16>
    %c0_4 = arith.constant 0 : index
    %c0_5 = arith.constant 0 : index
    %8 = vector.load %arg6[%c0_4, %c0_5] : memref<16x512xbf16, #tpu.memory_space<vmem>>, vector<3x128xbf16>
    tpu.vector_store %arg6[%c0_4, %c0_5], %7 {strides = array<i32>} : memref<16x512xbf16, #tpu.memory_space<vmem>>, vector<3x128xbf16>,
    %c4_i32_6 = arith.constant 4 : i32
    %9 = arith.muli %arg1, %c4_i32_6 : i32
    %c1_i32 = arith.constant 1 : i32
    %10 = arith.addi %9, %c1_i32 : i32
    %c0_7 = arith.constant 0 : index
    %11 = arith.index_cast %10 : i32 to index
    %c0_8 = arith.constant 0 : index
    %c0_9 = arith.constant 0 : index
    %12 = vector.load %arg4[%c0_7, %11, %c0_8, %c0_9] : memref<1x8x3x128xbf16, #tpu.memory_space<vmem>>, vector<1x1x3x128xbf16>
    %13 = vector.shape_cast %12 : vector<1x1x3x128xbf16> to vector<3x128xbf16>
    %c0_10 = arith.constant 0 : index
    %c128 = arith.constant 128 : index
    %14 = vector.load %arg6[%c0_10, %c128] : memref<16x512xbf16, #tpu.memory_space<vmem>>, vector<3x128xbf16>
    tpu.vector_store %arg6[%c0_10, %c128], %13 {strides = array<i32>} : memref<16x512xbf16, #tpu.memory_space<vmem>>, vector<3x128xbf16>,
    %c4_i32_11 = arith.constant 4 : i32
    %15 = arith.muli %arg1, %c4_i32_11 : i32
    %c2_i32 = arith.constant 2 : i32
    %16 = arith.addi %15, %c2_i32 : i32
    %c0_12 = arith.constant 0 : index
    %17 = arith.index_cast %16 : i32 to index
    %c0_13 = arith.constant 0 : index
    %c0_14 = arith.constant 0 : index
    %18 = vector.load %arg4[%c0_12, %17, %c0_13, %c0_14] : memref<1x8x3x128xbf16, #tpu.memory_space<vmem>>, vector<1x1x3x128xbf16>
    %19 = vector.shape_cast %18 : vector<1x1x3x128xbf16> to vector<3x128xbf16>
    %c0_15 = arith.constant 0 : index
    %c256 = arith.constant 256 : index
    %20 = vector.load %arg6[%c0_15, %c256] : memref<16x512xbf16, #tpu.memory_space<vmem>>, vector<3x128xbf16>
    tpu.vector_store %arg6[%c0_15, %c256], %19 {strides = array<i32>} : memref<16x512xbf16, #tpu.memory_space<vmem>>, vector<3x128xbf16>,
    %c4_i32_16 = arith.constant 4 : i32
    %21 = arith.muli %arg1, %c4_i32_16 : i32
    %c3_i32 = arith.constant 3 : i32
    %22 = arith.addi %21, %c3_i32 : i32
    %c0_17 = arith.constant 0 : index
    %23 = arith.index_cast %22 : i32 to index
    %c0_18 = arith.constant 0 : index
    %c0_19 = arith.constant 0 : index
    %24 = vector.load %arg4[%c0_17, %23, %c0_18, %c0_19] : memref<1x8x3x128xbf16, #tpu.memory_space<vmem>>, vector<1x1x3x128xbf16>
    %25 = vector.shape_cast %24 : vector<1x1x3x128xbf16> to vector<3x128xbf16>
    %c0_20 = arith.constant 0 : index
    %c384 = arith.constant 384 : index
    %26 = vector.load %arg6[%c0_20, %c384] : memref<16x512xbf16, #tpu.memory_space<vmem>>, vector<3x128xbf16>
    tpu.vector_store %arg6[%c0_20, %c384], %25 {strides = array<i32>} : memref<16x512xbf16, #tpu.memory_space<vmem>>, vector<3x128xbf16>,
    %c0_21 = arith.constant 0 : index
    %c0_22 = arith.constant 0 : index
    %c0_23 = arith.constant 0 : index
    %27 = vector.load %arg2[%c0_21, %c0_22, %c0_23] : memref<1x32x16xbf16, #tpu.memory_space<vmem>>, vector<1x32x16xbf16>
    %28 = vector.shape_cast %27 : vector<1x32x16xbf16> to vector<32x16xbf16>
    %c0_24 = arith.constant 0 : index
    %c0_25 = arith.constant 0 : index
    %29 = vector.load %arg6[%c0_24, %c0_25] : memref<16x512xbf16, #tpu.memory_space<vmem>>, vector<16x512xbf16>
    %cst = arith.constant dense<0.000000e+00> : vector<32x512xf32>
    %30 = tpu.matmul %28, %29, %cst {dimension_numbers = #tpu.dot_dimension_numbers<[1], [0], [0], [1], [0, 0, 1, 1], [], []>} : vector<32x16xbf16>, vector<16x512xbf16>, vector<32x512xf32> -> vector<32x512xf32>
    %31 = vector.extract_strided_slice %30 {offsets = [0, 0], sizes = [32, 128], strides = [1, 1]} : vector<32x512xf32> to vector<32x128xf32>
    %c0_26 = arith.constant 0 : index
    %c0_27 = arith.constant 0 : index
    %c0_28 = arith.constant 0 : index
    %32 = vector.load %arg3[%c0_26, %c0_27, %c0_28] : memref<1x32x1xf32, #tpu.memory_space<vmem>>, vector<1x32x1xf32>
    %33 = vector.shape_cast %32 : vector<1x32x1xf32> to vector<32x1xf32>
    %34 = vector.broadcast %33 : vector<32x1xf32> to vector<32x128xf32>
    %35 = arith.addf %31, %34 : vector<32x128xf32>
    %cst_29 = arith.constant 0.00999999977 : f32
    %36 = vector.broadcast %cst_29 : f32 to vector<32x128xf32>
    %37 = arith.mulf %36, %35 : vector<32x128xf32>
    %38 = arith.maximumf %35, %37 : vector<32x128xf32>
    %c0_30 = arith.constant 0 : index
    %c0_31 = arith.constant 0 : index
    %c0_32 = arith.constant 0 : index
    %c0_33 = arith.constant 0 : index
    %39 = vector.load %arg5[%c0_30, %c0_31, %c0_32, %c0_33] : memref<1x4x32x128xf32, #tpu.memory_space<vmem>>, vector<1x1x32x128xf32>
    %40 = vector.shape_cast %39 : vector<1x1x32x128xf32> to vector<32x128xf32>
    %41 = vector.shape_cast %38 : vector<32x128xf32> to vector<1x1x32x128xf32>
    tpu.vector_store %arg5[%c0_30, %c0_31, %c0_32, %c0_33], %41 {strides = array<i32>} : memref<1x4x32x128xf32, #tpu.memory_space<vmem>>, vector<1x1x32x128xf32>,
    %42 = vector.extract_strided_slice %30 {offsets = [0, 128], sizes = [32, 128], strides = [1, 1]} : vector<32x512xf32> to vector<32x128xf32>
    %c0_34 = arith.constant 0 : index
    %c0_35 = arith.constant 0 : index
    %c0_36 = arith.constant 0 : index
    %43 = vector.load %arg3[%c0_34, %c0_35, %c0_36] : memref<1x32x1xf32, #tpu.memory_space<vmem>>, vector<1x32x1xf32>
    %44 = vector.shape_cast %43 : vector<1x32x1xf32> to vector<32x1xf32>
    %45 = vector.broadcast %44 : vector<32x1xf32> to vector<32x128xf32>
    %46 = arith.addf %42, %45 : vector<32x128xf32>
    %cst_37 = arith.constant 0.00999999977 : f32
    %47 = vector.broadcast %cst_37 : f32 to vector<32x128xf32>
    %48 = arith.mulf %47, %46 : vector<32x128xf32>
    %49 = arith.maximumf %46, %48 : vector<32x128xf32>
    %c0_38 = arith.constant 0 : index
    %c1 = arith.constant 1 : index
    %c0_39 = arith.constant 0 : index
    %c0_40 = arith.constant 0 : index
    %50 = vector.load %arg5[%c0_38, %c1, %c0_39, %c0_40] : memref<1x4x32x128xf32, #tpu.memory_space<vmem>>, vector<1x1x32x128xf32>
    %51 = vector.shape_cast %50 : vector<1x1x32x128xf32> to vector<32x128xf32>
    %52 = vector.shape_cast %49 : vector<32x128xf32> to vector<1x1x32x128xf32>
    tpu.vector_store %arg5[%c0_38, %c1, %c0_39, %c0_40], %52 {strides = array<i32>} : memref<1x4x32x128xf32, #tpu.memory_space<vmem>>, vector<1x1x32x128xf32>,
    %53 = vector.extract_strided_slice %30 {offsets = [0, 256], sizes = [32, 128], strides = [1, 1]} : vector<32x512xf32> to vector<32x128xf32>
    %c0_41 = arith.constant 0 : index
    %c0_42 = arith.constant 0 : index
    %c0_43 = arith.constant 0 : index
    %54 = vector.load %arg3[%c0_41, %c0_42, %c0_43] : memref<1x32x1xf32, #tpu.memory_space<vmem>>, vector<1x32x1xf32>
    %55 = vector.shape_cast %54 : vector<1x32x1xf32> to vector<32x1xf32>
    %56 = vector.broadcast %55 : vector<32x1xf32> to vector<32x128xf32>
    %57 = arith.addf %53, %56 : vector<32x128xf32>
    %cst_44 = arith.constant 0.00999999977 : f32
    %58 = vector.broadcast %cst_44 : f32 to vector<32x128xf32>
    %59 = arith.mulf %58, %57 : vector<32x128xf32>
    %60 = arith.maximumf %57, %59 : vector<32x128xf32>
    %c0_45 = arith.constant 0 : index
    %c2 = arith.constant 2 : index
    %c0_46 = arith.constant 0 : index
    %c0_47 = arith.constant 0 : index
    %61 = vector.load %arg5[%c0_45, %c2, %c0_46, %c0_47] : memref<1x4x32x128xf32, #tpu.memory_space<vmem>>, vector<1x1x32x128xf32>
    %62 = vector.shape_cast %61 : vector<1x1x32x128xf32> to vector<32x128xf32>
    %63 = vector.shape_cast %60 : vector<32x128xf32> to vector<1x1x32x128xf32>
    tpu.vector_store %arg5[%c0_45, %c2, %c0_46, %c0_47], %63 {strides = array<i32>} : memref<1x4x32x128xf32, #tpu.memory_space<vmem>>, vector<1x1x32x128xf32>,
    %64 = vector.extract_strided_slice %30 {offsets = [0, 384], sizes = [32, 128], strides = [1, 1]} : vector<32x512xf32> to vector<32x128xf32>
    %c0_48 = arith.constant 0 : index
    %c0_49 = arith.constant 0 : index
    %c0_50 = arith.constant 0 : index
    %65 = vector.load %arg3[%c0_48, %c0_49, %c0_50] : memref<1x32x1xf32, #tpu.memory_space<vmem>>, vector<1x32x1xf32>
    %66 = vector.shape_cast %65 : vector<1x32x1xf32> to vector<32x1xf32>
    %67 = vector.broadcast %66 : vector<32x1xf32> to vector<32x128xf32>
    %68 = arith.addf %64, %67 : vector<32x128xf32>
    %cst_51 = arith.constant 0.00999999977 : f32
    %69 = vector.broadcast %cst_51 : f32 to vector<32x128xf32>
    %70 = arith.mulf %69, %68 : vector<32x128xf32>
    %71 = arith.maximumf %68, %70 : vector<32x128xf32>
    %c0_52 = arith.constant 0 : index
    %c3 = arith.constant 3 : index
    %c0_53 = arith.constant 0 : index
    %c0_54 = arith.constant 0 : index
    %72 = vector.load %arg5[%c0_52, %c3, %c0_53, %c0_54] : memref<1x4x32x128xf32, #tpu.memory_space<vmem>>, vector<1x1x32x128xf32>
    %73 = vector.shape_cast %72 : vector<1x1x32x128xf32> to vector<32x128xf32>
    %74 = vector.shape_cast %71 : vector<32x128xf32> to vector<1x1x32x128xf32>
    tpu.vector_store %arg5[%c0_52, %c3, %c0_53, %c0_54], %74 {strides = array<i32>} : memref<1x4x32x128xf32, #tpu.memory_space<vmem>>, vector<1x1x32x128xf32>,
    return
  }
  func.func @transform_0(%arg0: i32, %arg1: i32) -> (i32, i32, i32) {
    %c0_i32 = arith.constant 0 : i32
    %c0_i32_0 = arith.constant 0 : i32
    %c0_i32_1 = arith.constant 0 : i32
    return %arg0, %c0_i32, %c0_i32_0 : i32, i32, i32
  }
  func.func @transform_1(%arg0: i32, %arg1: i32) -> (i32, i32, i32) {
    %c0_i32 = arith.constant 0 : i32
    %c0_i32_0 = arith.constant 0 : i32
    %c0_i32_1 = arith.constant 0 : i32
    return %arg0, %c0_i32, %c0_i32_0 : i32, i32, i32
  }
  func.func @transform_2(%arg0: i32, %arg1: i32) -> (i32, i32, i32, i32) {
    %c0_i32 = arith.constant 0 : i32
    %c0_i32_0 = arith.constant 0 : i32
    %c0_i32_1 = arith.constant 0 : i32
    %c0_i32_2 = arith.constant 0 : i32
    return %arg0, %c0_i32, %c0_i32_0, %c0_i32_1 : i32, i32, i32, i32
  }
  func.func @transform_3(%arg0: i32, %arg1: i32) -> (i32, i32, i32, i32) {
    %c0_i32 = arith.constant 0 : i32
    %c0_i32_0 = arith.constant 0 : i32
    %c0_i32_1 = arith.constant 0 : i32
    return %arg0, %arg1, %c0_i32, %c0_i32_0 : i32, i32, i32, i32
  }
}

</mosaic_0001>

<llo_original>
// kernel: gin_gc_replay_block_3d.1
$region0: #{gin_gc_replay_block_3d.1}
  #allocation0 [shape = 'u32[]', space=smem, size = 0x4, offset = 0x4, fixed_abs, tag = 'smem constant byte address 0x4 - core index']
  #allocation1 [shape = 'u32[72,128]{1,0:T(1,128)}', space=vmem, size = 0x9000, scoped, tag = 'internal scratch']
  #allocation2 [shape = 'bf16[16,512]{1,0:T(8,128)(2,1)}', space=vmem, size = 0x4000, scoped, tag = 'scratch operand']
  %s0 = inlined_call_operand.vmem [shape: bf16[2,32,16], index: 0, kind: input, shape index: {}]
  %s1 = inlined_call_operand.vmem [shape: f32[2,32,1], index: 1, kind: input, shape index: {}]
  %s2 = inlined_call_operand.vmem [shape: bf16[2,8,3,128], index: 2, kind: input, shape index: {}]
  %s3 = inlined_call_operand.vmem [shape: f32[2,8,32,128], index: 3, kind: output, shape index: {}]
  %s4 = sld [smem:[#allocation0]]
  $region49: #{gin_gc_replay_block_3d.1} parent=0
    _
  %s6 = ssub.s32 1, %s4
  %s7 = scalar_select 0, %s6, %s4
  loop: start=0, step=1, limit=6
  $region2: #{gin_gc_replay_block_3d.1} parent=0 // loop_pre_header
    _
  $region3: #{gin_gc_replay_block_3d.1} parent=0 // loop_header
    %s9 = sphi 0, %s13
    %p10 = scmp.ge.s32.totalorder %s9, 6
    %s16 = sphi 0, %s28
    %s17 = sphi 0, %s24
    %s18 = sphi 0, %s16
    %s19 = sphi 0, %s17
    %s20 = sphi 0, %s18
    %s21 = sphi 0, %s19
    %s31 = sphi 0, %s33
    %s34 = sphi 0, %s31
    %s35 = sphi 0, %s34
    %s51 = sphi 0, %s35
    %s57 = sphi 0, %s59
    %s60 = sphi 0, %s57
    %s61 = sphi 0, %s60
    %s77 = sphi 0, %s61
    %s83 = sphi 0, %s85
    %s86 = sphi 0, %s83
    %s87 = sphi 0, %s86
    %s103 = sphi 0, %s87
    %s111 = sphi 0, %s113
    %s114 = sphi 0, %s111
    %s115 = sphi 0, %s114
    %s131 = sphi 0, %s115
  $region4: #{gin_gc_replay_block_3d.1} parent=0 // loop_header_branch
    %12 = sbr.rel (%p10) target = $region8
  $region5: #{gin_gc_replay_block_3d.1} parent=0 // loop_body
    %s14 = ssub.s32 %s9, 1
    %s15 = ssub.s32 %s9, 2
    %s22 = sadd.s32 1, %s17
    %p23 = scmp.ge.s32.totalorder %s22, 2
    %s24 = scalar_select %p23, 0, %s22
    %s25 = sadd.s32 1, %s16
    %s26 = scalar_select %p23, %s25, %s16
    %p27 = scmp.ge.s32.totalorder %s26, 2
    %s28 = scalar_select %p27, 0, %s26
    %s29 = ssub.s32 %s16, %s28
    %p30 = scmp.eq.s32.totalorder %s29, 0
    %s32 = sadd.s32 %s31, 1
    %s33 = scalar_select %p30, %s31, %s32
    %p36 = pneg %p30
    %p37 = scmp.eq.s32.totalorder %s9, 3
    %p38 = por %p36, %p37
    %p39 = scmp.ne.s32.totalorder %s31, %s34
    %p40 = scmp.eq.s32.totalorder %s9, 0
    %p41 = por %p39, %p40
    %p42 = scmp.ne.s32.totalorder %s31, %s34
    %p43 = scmp.eq.s32.totalorder %s14, 3
    %p44 = por %p42, %p43
    %p45 = scmp.ne.s32.totalorder %s34, %s35
    %p46 = scmp.eq.s32.totalorder %s14, 0
    %p47 = por %p45, %p46
    %p48 = scmp.ne.s32.totalorder %s34, %s35
    %p49 = scmp.eq.s32.totalorder %s15, 3
    %p50 = por %p48, %p49
    %p52 = scmp.ne.s32.totalorder %s35, %s51
    %p53 = scmp.eq.s32.totalorder %s15, 0
    %p54 = por %p52, %p53
    %s55 = ssub.s32 %s16, %s28
    %p56 = scmp.eq.s32.totalorder %s55, 0
    %s58 = sadd.s32 %s57, 1
    %s59 = scalar_select %p56, %s57, %s58
    %p62 = pneg %p56
    %p63 = scmp.eq.s32.totalorder %s9, 3
    %p64 = por %p62, %p63
    %p65 = scmp.ne.s32.totalorder %s57, %s60
    %p66 = scmp.eq.s32.totalorder %s9, 0
    %p67 = por %p65, %p66
    %p68 = scmp.ne.s32.totalorder %s57, %s60
    %p69 = scmp.eq.s32.totalorder %s14, 3
    %p70 = por %p68, %p69
    %p71 = scmp.ne.s32.totalorder %s60, %s61
    %p72 = scmp.eq.s32.totalorder %s14, 0
    %p73 = por %p71, %p72
    %p74 = scmp.ne.s32.totalorder %s60, %s61
    %p75 = scmp.eq.s32.totalorder %s15, 3
    %p76 = por %p74, %p75
    %p78 = scmp.ne.s32.totalorder %s61, %s77
    %p79 = scmp.eq.s32.totalorder %s15, 0
    %p80 = por %p78, %p79
    %s81 = ssub.s32 %s16, %s28
    %p82 = scmp.eq.s32.totalorder %s81, 0
    %s84 = sadd.s32 %s83, 1
    %s85 = scalar_select %p82, %s83, %s84
    %p88 = pneg %p82
    %p89 = scmp.eq.s32.totalorder %s9, 3
    %p90 = por %p88, %p89
    %p91 = scmp.ne.s32.totalorder %s83, %s86
    %p92 = scmp.eq.s32.totalorder %s9, 0
    %p93 = por %p91, %p92
    %p94 = scmp.ne.s32.totalorder %s83, %s86
    %p95 = scmp.eq.s32.totalorder %s14, 3
    %p96 = por %p94, %p95
    %p97 = scmp.ne.s32.totalorder %s86, %s87
    %p98 = scmp.eq.s32.totalorder %s14, 0
    %p99 = por %p97, %p98
    %p100 = scmp.ne.s32.totalorder %s86, %s87
    %p101 = scmp.eq.s32.totalorder %s15, 3
    %p102 = por %p100, %p101
    %p104 = scmp.ne.s32.totalorder %s87, %s103
    %p105 = scmp.eq.s32.totalorder %s15, 0
    %p106 = por %p104, %p105
    %s107 = ssub.s32 %s16, %s28
    %s108 = ssub.s32 %s17, %s24
    %s109 = sor.u32 %s107, %s108
    %p110 = scmp.eq.s32.totalorder %s109, 0
    %s112 = sadd.s32 %s111, 1
    %s113 = scalar_select %p110, %s111, %s112
    %p116 = pneg %p110
    %p117 = scmp.eq.s32.totalorder %s9, 3
    %p118 = por %p116, %p117
    %p119 = scmp.ne.s32.totalorder %s111, %s114
    %p120 = scmp.eq.s32.totalorder %s9, 0
    %p121 = por %p119, %p120
    %p122 = scmp.ne.s32.totalorder %s111, %s114
    %p123 = scmp.eq.s32.totalorder %s14, 3
    %p124 = por %p122, %p123
    %p125 = scmp.ne.s32.totalorder %s114, %s115
    %p126 = scmp.eq.s32.totalorder %s14, 0
    %p127 = por %p125, %p126
    %p128 = scmp.ne.s32.totalorder %s114, %s115
    %p129 = scmp.eq.s32.totalorder %s15, 3
    %p130 = por %p128, %p129
    %p132 = scmp.ne.s32.totalorder %s115, %s131
    %p133 = scmp.eq.s32.totalorder %s15, 0
    %p134 = por %p132, %p133
    %p135 = scmp.le.s32.totalorder 1, %s9
    %p136 = scmp.lt.s32.totalorder %s9, 5
    %p137 = pnand %p135, %p136
    %p138 = pneg %p137
    // Predicated region
    $region9: #{gin_gc_replay_block_3d.1} parent=5 // pred_check
      _
    $region10: #{gin_gc_replay_block_3d.1} parent=5 // pred_check_branch
      %140 = sbr.rel (%p137) target = $region12
    $region11: #{gin_gc_replay_block_3d.1} parent=5 // pred_region
      %s141 = ssub.s32 %s9, 1
    $region12: #{gin_gc_replay_block_3d.1} parent=5 // pred_fallthru
      _
    %p142 = scmp.lt.s32.totalorder %s9, 4
    // Predicated region
    $region13: #{gin_gc_replay_block_3d.1} parent=5 // pred_check
      %p143 = pneg %p142
    $region14: #{gin_gc_replay_block_3d.1} parent=5 // pred_check_branch
      %145 = sbr.rel (%p143) target = $region16
    $region15: #{gin_gc_replay_block_3d.1} parent=5 // pred_region
      // Predicated region
      $region17: #{gin_gc_replay_block_3d.1} parent=15 // pred_check
        %p146 = pneg %p41
      $region18: #{gin_gc_replay_block_3d.1} parent=15 // pred_check_branch
        %148 = sbr.rel (%p146) target = $region20
      $region19: #{gin_gc_replay_block_3d.1} parent=15 // pred_region
        %p149 = scmp.lt.s32.totalorder %s16, 1
        %s150 = scalar_select %p149, %s16, 1
        %s151 = smul.addr %s150, 4
        %s152 = smul.addr %s151, 4
        %s153 = scalar_lea.vmem %s0, %s152
      $region20: #{gin_gc_replay_block_3d.1} parent=15 // pred_fallthru
        _
      // Predicated region
      $region21: #{gin_gc_replay_block_3d.1} parent=15 // pred_check
        %p154 = pneg %p67
      $region22: #{gin_gc_replay_block_3d.1} parent=15 // pred_check_branch
        %156 = sbr.rel (%p154) target = $region24
      $region23: #{gin_gc_replay_block_3d.1} parent=15 // pred_region
        %p157 = scmp.lt.s32.totalorder %s16, 1
        %s158 = scalar_select %p157, %s16, 1
        %s159 = smul.addr %s158, 4
        %s160 = smul.addr %s159, 8
        %s161 = scalar_lea.vmem %s1, %s160
      $region24: #{gin_gc_replay_block_3d.1} parent=15 // pred_fallthru
        _
      // Predicated region
      $region25: #{gin_gc_replay_block_3d.1} parent=15 // pred_check
        %p162 = pneg %p93
      $region26: #{gin_gc_replay_block_3d.1} parent=15 // pred_check_branch
        %164 = sbr.rel (%p162) target = $region28
      $region27: #{gin_gc_replay_block_3d.1} parent=15 // pred_region
        %p165 = scmp.lt.s32.totalorder %s16, 1
        %s166 = scalar_select %p165, %s16, 1
        %s167 = smul.addr %s166, 8
        %s168 = smul.addr %s167, 2
        %s169 = scalar_lea.vmem %s2, %s168
      $region28: #{gin_gc_replay_block_3d.1} parent=15 // pred_fallthru
        _
    $region16: #{gin_gc_replay_block_3d.1} parent=5 // pred_fallthru
      _
    %p170 = scmp.le.s32.totalorder 1, %s9
    %p171 = scmp.lt.s32.totalorder %s9, 5
    %p172 = pnand %p170, %p171
    %p173 = pneg %p172
    // Predicated region
    $region29: #{gin_gc_replay_block_3d.1} parent=5 // pred_check
      _
    $region30: #{gin_gc_replay_block_3d.1} parent=5 // pred_check_branch
      %175 = sbr.rel (%p172) target = $region32
    $region31: #{gin_gc_replay_block_3d.1} parent=5 // pred_region
      %s176 = ssub.s32 %s9, 1
      %p177 = scmp.lt.s32.totalorder %s18, 1
      %s178 = scalar_select %p177, %s18, 1
      %s179 = smul.addr %s178, 4
      %s180 = smul.addr %s179, 4
      %s181 = scalar_lea.vmem %s0, %s180
      %p182 = pneg %p47
      %p183 = pneg %p44
      %p184 = scmp.lt.s32.totalorder %s18, 1
      %s185 = scalar_select %p184, %s18, 1
      %s186 = smul.addr %s185, 4
      %s187 = smul.addr %s186, 8
      %s188 = scalar_lea.vmem %s1, %s187
      %p189 = pneg %p73
      %p190 = pneg %p70
      %p191 = scmp.lt.s32.totalorder %s18, 1
      %s192 = scalar_select %p191, %s18, 1
      %s193 = smul.addr %s192, 8
      %s194 = smul.addr %s193, 2
      %s195 = scalar_lea.vmem %s2, %s194
      %p196 = pneg %p99
      %p197 = pneg %p96
      %p198 = pneg %p127
      %p199 = pneg %p124
      %s200 = smul.u32 4, %s19
      %p201 = scmp.lt.s32.totalorder %s18, 1
      %s202 = scalar_select %p201, %s18, 1
      %p203 = scmp.lt.s32.totalorder %s200, 7
      %s204 = scalar_select %p203, %s200, 7
      %s205 = smul.addr %s204, 4
      %s206 = smul.addr %s202, 32
      %s207 = sadd.s32 %s205, %s206
      %s208 = smul.addr %s207, 8
      %s209 = scalar_lea.vmem %s3, %s208
      %p210 = scmp.lt.s32.totalorder %s18, 1
      %s211 = scalar_select %p210, %s18, 1
      %s212 = smul.addr %s211, 4
      %s213 = smul.addr %s212, 4
      %s214 = scalar_lea.vmem %s0, %s213
      %p215 = scmp.lt.s32.totalorder %s18, 1
      %s216 = scalar_select %p215, %s18, 1
      %s217 = smul.addr %s216, 4
      %s218 = smul.addr %s217, 8
      %s219 = scalar_lea.vmem %s1, %s218
      %p220 = scmp.lt.s32.totalorder %s18, 1
      %s221 = scalar_select %p220, %s18, 1
      %s222 = smul.addr %s221, 8
      %s223 = smul.addr %s222, 2
      %s224 = scalar_lea.vmem %s2, %s223
      %s225 = smul.u32 4, %s19
      %p226 = scmp.lt.s32.totalorder %s18, 1
      %s227 = scalar_select %p226, %s18, 1
      %p228 = scmp.lt.s32.totalorder %s225, 7
      %s229 = scalar_select %p228, %s225, 7
      %s230 = smul.addr %s229, 4
      %s231 = smul.addr %s227, 32
      %s232 = sadd.s32 %s230, %s231
      %s233 = smul.addr %s232, 8
      %s234 = scalar_lea.vmem %s3, %s233
      %s235 = smul.u32 4, %s19
      %p237 = scmp.eq.s32.totalorder %s19, 0
      // Predicated region
      $region33: #{gin_gc_replay_block_3d.1} parent=31 // pred_check
        %p238 = pneg %p237
      $region34: #{gin_gc_replay_block_3d.1} parent=31 // pred_check_branch
        %240 = sbr.rel (%p238) target = $region36
      $region35: #{gin_gc_replay_block_3d.1} parent=31 // pred_region
        %vm241 = vcmask 1043457
        %vm242 = vsmask.f32 7942
        %vm243 = vmand %vm241, %vm242
        %vm244 = vcmask 1047557
        %vm245 = vsmask.f32 7958
        %vm246 = vmand %vm244, %vm245
        %vm247 = vmor %vm246, %vm243
        %v248 = vld [vmem:[#allocation2] sm:$0xee]
        %v249 = vsel %vm247, 0, %v248
        %250 = vst [vmem:[#allocation2] sm:$0xee] %v249
        %v251 = vld [vmem:[#allocation2 + $0x8] sm:$0xee]
        %v252 = vsel %vm247, 0, %v251
        %253 = vst [vmem:[#allocation2 + $0x8] sm:$0xee] %v252
        %254 = vst [vmem:[#allocation2 + $0x10] sm:$0xff] 0
        %255 = vst [vmem:[#allocation2 + $0x18] sm:$0xff] 0
      $region36: #{gin_gc_replay_block_3d.1} parent=31 // pred_fallthru
        _
      %s256 = smul.u32 %s19, 4
      %s257 = smul.addr %s256, 2
      %s258 = scalar_lea.vmem %s224, %s257
      %v259 = vld [vmem:[%s258] sm:$0x3]
      %vm260 = vcmask 1041408
      %vm261 = vsmask.f32 1280
      %vm262 = vmand %vm260, %vm261
      %v263 = vld [vmem:[#allocation2] sm:$0x3]
      %v264 = vsel %vm262, %v259, %v263
      %265 = vst [vmem:[#allocation2] sm:$0x3] %v264
      %s266 = sadd.s32 %s256, 1
      %s267 = smul.addr %s266, 2
      %s268 = scalar_lea.vmem %s224, %s267
      %v269 = vld [vmem:[%s268] sm:$0x3]
      %v270 = vld [vmem:[#allocation2 + $0x4] sm:$0x3]
      %v271 = vsel %vm262, %v269, %v270
      %272 = vst [vmem:[#allocation2 + $0x4] sm:$0x3] %v271
      %s273 = sadd.s32 %s256, 2
      %s274 = smul.addr %s273, 2
      %s275 = scalar_lea.vmem %s224, %s274
      %v276 = vld [vmem:[%s275] sm:$0x3]
      %v277 = vld [vmem:[#allocation2 + $0x8] sm:$0x3]
      %v278 = vsel %vm262, %v276, %v277
      %279 = vst [vmem:[#allocation2 + $0x8] sm:$0x3] %v278
      %s280 = sadd.s32 %s256, 3
      %s281 = smul.addr %s280, 2
      %s282 = scalar_lea.vmem %s224, %s281
      %v283 = vld [vmem:[%s282] sm:$0x3]
      %v284 = vld [vmem:[#allocation2 + $0xc] sm:$0x3]
      %v285 = vsel %vm262, %v283, %v284
      %286 = vst [vmem:[#allocation2 + $0xc] sm:$0x3] %v285
      %v287 = vld [vmem:[%s214] sm:$0xf]
      %v288 = vld [vmem:[%s214 + $0x4] sm:$0xf]
      %v289 = vld [vmem:[%s214 + $0x8] sm:$0xf]
      %v290 = vld [vmem:[%s214 + $0xc] sm:$0xf]
      %v291 = vld [vmem:[#allocation2] sm:$0xff]
      %v292 = vld [vmem:[#allocation2 + $0x8] sm:$0xff]
      %v293 = vld [vmem:[#allocation2 + $0x10] sm:$0xff]
      %v294 = vld [vmem:[#allocation2 + $0x18] sm:$0xff]
      %v299 = vunpack.c.l.b16 %v287
      %v300 = vunpack.c.l.b16 %v288
      %v301 = vunpack.c.l.b16 %v289
      %v302 = vunpack.c.l.b16 %v290
      %v303 = vpack.c.b16 %v300, %v299
      %v304 = vpack.c.b16 %v302, %v301
      %v309 = vunpack.c.l.b16 %v291
      %v310 = vunpack.c.h.b16 %v291
      %v311 = vunpack.c.l.b16 %v292
      %v312 = vunpack.c.h.b16 %v292
      %v313 = vunpack.c.l.b16 %v293
      %v314 = vunpack.c.h.b16 %v293
      %v315 = vunpack.c.l.b16 %v294
      %v316 = vunpack.c.h.b16 %v294
      %v317 = vpack.c.b16 %v313, %v309
      %v318 = vpack.c.b16 %v314, %v310
      %v319 = vpack.c.b16 %v315, %v311
      %v320 = vpack.c.b16 %v316, %v312
      %vm325 = vcmask 130048
      %v327 = vsel %vm325, %v303, 0
      %v330 = vsel %vm325, %v304, 0
      %332 = vmatpush.bf16.msra.mxu0 0
      %333 = vmatpush.bf16.msra.mxu0 0
      %334 = vmatpush.bf16.msra.mxu0 0
      %335 = vmatpush.bf16.msra.mxu0 0
      %336 = vmatpush.bf16.msra.mxu0 0
      %337 = vmatpush.bf16.msra.mxu0 0
      %338 = vmatpush.bf16.msra.mxu0 0
      %339 = vmatpush.bf16.msra.mxu0 %v317
      %340 = vmatmul.bf16.gmra.mxu0 %v327
      %v341 = vpop.f32.mrf.mxu0
      %v342 = vadd.f32 0.0, %v341
      %v343 = vpop.f32.mrf.mxu0
      %v344 = vadd.f32 0.0, %v343
      %345 = vmatmul.bf16.gmra.mxu0 %v330
      %v346 = vpop.f32.mrf.mxu0
      %v347 = vadd.f32 0.0, %v346
      %v348 = vpop.f32.mrf.mxu0
      %v349 = vadd.f32 0.0, %v348
      %350 = vdwg.mxu0
      %351 = vmatpush.bf16.msra.mxu0 0
      %352 = vmatpush.bf16.msra.mxu0 0
      %353 = vmatpush.bf16.msra.mxu0 0
      %354 = vmatpush.bf16.msra.mxu0 0
      %355 = vmatpush.bf16.msra.mxu0 0
      %356 = vmatpush.bf16.msra.mxu0 0
      %357 = vmatpush.bf16.msra.mxu0 0
      %358 = vmatpush.bf16.msra.mxu0 %v318
      %359 = vmatmul.bf16.gmra.mxu0 %v327
      %v360 = vpop.f32.mrf.mxu0
      %v361 = vadd.f32 0.0, %v360
      %v362 = vpop.f32.mrf.mxu0
      %v363 = vadd.f32 0.0, %v362
      %364 = vmatmul.bf16.gmra.mxu0 %v330
      %v365 = vpop.f32.mrf.mxu0
      %v366 = vadd.f32 0.0, %v365
      %v367 = vpop.f32.mrf.mxu0
      %v368 = vadd.f32 0.0, %v367
      %369 = vdwg.mxu0
      %370 = vmatpush.bf16.msra.mxu0 0
      %371 = vmatpush.bf16.msra.mxu0 0
      %372 = vmatpush.bf16.msra.mxu0 0
      %373 = vmatpush.bf16.msra.mxu0 0
      %374 = vmatpush.bf16.msra.mxu0 0
      %375 = vmatpush.bf16.msra.mxu0 0
      %376 = vmatpush.bf16.msra.mxu0 0
      %377 = vmatpush.bf16.msra.mxu0 %v319
      %378 = vmatmul.bf16.gmra.mxu0 %v327
      %v379 = vpop.f32.mrf.mxu0
      %v380 = vadd.f32 0.0, %v379
      %v381 = vpop.f32.mrf.mxu0
      %v382 = vadd.f32 0.0, %v381
      %383 = vmatmul.bf16.gmra.mxu0 %v330
      %v384 = vpop.f32.mrf.mxu0
      %v385 = vadd.f32 0.0, %v384
      %v386 = vpop.f32.mrf.mxu0
      %v387 = vadd.f32 0.0, %v386
      %388 = vdwg.mxu0
      %389 = vmatpush.bf16.msra.mxu0 0
      %390 = vmatpush.bf16.msra.mxu0 0
      %391 = vmatpush.bf16.msra.mxu0 0
      %392 = vmatpush.bf16.msra.mxu0 0
      %393 = vmatpush.bf16.msra.mxu0 0
      %394 = vmatpush.bf16.msra.mxu0 0
      %395 = vmatpush.bf16.msra.mxu0 0
      %396 = vmatpush.bf16.msra.mxu0 %v320
      %397 = vmatmul.bf16.gmra.mxu0 %v327
      %v398 = vpop.f32.mrf.mxu0
      %v399 = vadd.f32 0.0, %v398
      %v400 = vpop.f32.mrf.mxu0
      %v401 = vadd.f32 0.0, %v400
      %402 = vmatmul.bf16.gmra.mxu0 %v330
      %v403 = vpop.f32.mrf.mxu0
      %v404 = vadd.f32 0.0, %v403
      %v405 = vpop.f32.mrf.mxu0
      %v406 = vadd.f32 0.0, %v405
      %407 = vdwg.mxu0
      %v408 = vld [vmem:[%s219] sm:$0xff]
      %v409 = vld [vmem:[%s219 + $0x8] sm:$0xff]
      %v410 = vld [vmem:[%s219 + $0x10] sm:$0xff]
      %v411 = vld [vmem:[%s219 + $0x18] sm:$0xff]
      %413 = vset.pattern.permute.xlu0 0
      %414 = vperm.xlu0 %413, %v408
      %v415 = vpop.permute.xlu0 %414
      %418 = vset.pattern.permute.xlu0 0
      %419 = vperm.xlu0 %418, %v409
      %v420 = vpop.permute.xlu0 %419
      %423 = vset.pattern.permute.xlu0 0
      %424 = vperm.xlu0 %423, %v410
      %v425 = vpop.permute.xlu0 %424
      %428 = vset.pattern.permute.xlu0 0
      %429 = vperm.xlu0 %428, %v411
      %v430 = vpop.permute.xlu0 %429
      %v432 = vadd.f32 %v342, %v415
      %v433 = vadd.f32 %v344, %v420
      %v434 = vadd.f32 %v347, %v425
      %v435 = vadd.f32 %v349, %v430
      %v436 = vmul.f32 %v432, 0.01
      %v437 = vmul.f32 %v433, 0.01
      %v438 = vmul.f32 %v434, 0.01
      %v439 = vmul.f32 %v435, 0.01
      %v440 = vmax.f32 %v432, %v436
      %v441 = vmax.f32 %v433, %v437
      %v442 = vmax.f32 %v434, %v438
      %v443 = vmax.f32 %v435, %v439
      %444 = vst [vmem:[%s234] sm:$0xff] %v440
      %445 = vst [vmem:[%s234 + $0x8] sm:$0xff] %v441
      %446 = vst [vmem:[%s234 + $0x10] sm:$0xff] %v442
      %447 = vst [vmem:[%s234 + $0x18] sm:$0xff] %v443
      %v448 = vld [vmem:[%s219] sm:$0xff]
      %v449 = vld [vmem:[%s219 + $0x8] sm:$0xff]
      %v450 = vld [vmem:[%s219 + $0x10] sm:$0xff]
      %v451 = vld [vmem:[%s219 + $0x18] sm:$0xff]
      %453 = vset.pattern.permute.xlu0 0
      %454 = vperm.xlu0 %453, %v448
      %v455 = vpop.permute.xlu0 %454
      %458 = vset.pattern.permute.xlu0 0
      %459 = vperm.xlu0 %458, %v449
      %v460 = vpop.permute.xlu0 %459
      %463 = vset.pattern.permute.xlu0 0
      %464 = vperm.xlu0 %463, %v450
      %v465 = vpop.permute.xlu0 %464
      %468 = vset.pattern.permute.xlu0 0
      %469 = vperm.xlu0 %468, %v451
      %v470 = vpop.permute.xlu0 %469
      %v472 = vadd.f32 %v361, %v455
      %v473 = vadd.f32 %v363, %v460
      %v474 = vadd.f32 %v366, %v465
      %v475 = vadd.f32 %v368, %v470
      %v476 = vmul.f32 %v472, 0.01
      %v477 = vmul.f32 %v473, 0.01
      %v478 = vmul.f32 %v474, 0.01
      %v479 = vmul.f32 %v475, 0.01
      %v480 = vmax.f32 %v472, %v476
      %v481 = vmax.f32 %v473, %v477
      %v482 = vmax.f32 %v474, %v478
      %v483 = vmax.f32 %v475, %v479
      %s484 = scalar_lea.vmem %s234, 32
      %485 = vst [vmem:[%s484] sm:$0xff] %v480
      %486 = vst [vmem:[%s484 + $0x8] sm:$0xff] %v481
      %487 = vst [vmem:[%s484 + $0x10] sm:$0xff] %v482
      %488 = vst [vmem:[%s484 + $0x18] sm:$0xff] %v483
      %v489 = vld [vmem:[%s219] sm:$0xff]
      %v490 = vld [vmem:[%s219 + $0x8] sm:$0xff]
      %v491 = vld [vmem:[%s219 + $0x10] sm:$0xff]
      %v492 = vld [vmem:[%s219 + $0x18] sm:$0xff]
      %494 = vset.pattern.permute.xlu0 0
      %495 = vperm.xlu0 %494, %v489
      %v496 = vpop.permute.xlu0 %495
      %499 = vset.pattern.permute.xlu0 0
      %500 = vperm.xlu0 %499, %v490
      %v501 = vpop.permute.xlu0 %500
      %504 = vset.pattern.permute.xlu0 0
      %505 = vperm.xlu0 %504, %v491
      %v506 = vpop.permute.xlu0 %505
      %509 = vset.pattern.permute.xlu0 0
      %510 = vperm.xlu0 %509, %v492
      %v511 = vpop.permute.xlu0 %510
      %v513 = vadd.f32 %v380, %v496
      %v514 = vadd.f32 %v382, %v501
      %v515 = vadd.f32 %v385, %v506
      %v516 = vadd.f32 %v387, %v511
      %v517 = vmul.f32 %v513, 0.01
      %v518 = vmul.f32 %v514, 0.01
      %v519 = vmul.f32 %v515, 0.01
      %v520 = vmul.f32 %v516, 0.01
      %v521 = vmax.f32 %v513, %v517
      %v522 = vmax.f32 %v514, %v518
      %v523 = vmax.f32 %v515, %v519
      %v524 = vmax.f32 %v516, %v520
      %s525 = scalar_lea.vmem %s234, 64
      %526 = vst [vmem:[%s525] sm:$0xff] %v521
      %527 = vst [vmem:[%s525 + $0x8] sm:$0xff] %v522
      %528 = vst [vmem:[%s525 + $0x10] sm:$0xff] %v523
      %529 = vst [vmem:[%s525 + $0x18] sm:$0xff] %v524
      %v530 = vld [vmem:[%s219] sm:$0xff]
      %v531 = vld [vmem:[%s219 + $0x8] sm:$0xff]
      %v532 = vld [vmem:[%s219 + $0x10] sm:$0xff]
      %v533 = vld [vmem:[%s219 + $0x18] sm:$0xff]
      %535 = vset.pattern.permute.xlu0 0
      %536 = vperm.xlu0 %535, %v530
      %v537 = vpop.permute.xlu0 %536
      %540 = vset.pattern.permute.xlu0 0
      %541 = vperm.xlu0 %540, %v531
      %v542 = vpop.permute.xlu0 %541
      %545 = vset.pattern.permute.xlu0 0
      %546 = vperm.xlu0 %545, %v532
      %v547 = vpop.permute.xlu0 %546
      %550 = vset.pattern.permute.xlu0 0
      %551 = vperm.xlu0 %550, %v533
      %v552 = vpop.permute.xlu0 %551
      %v554 = vadd.f32 %v399, %v537
      %v555 = vadd.f32 %v401, %v542
      %v556 = vadd.f32 %v404, %v547
      %v557 = vadd.f32 %v406, %v552
      %v558 = vmul.f32 %v554, 0.01
      %v559 = vmul.f32 %v555, 0.01
      %v560 = vmul.f32 %v556, 0.01
      %v561 = vmul.f32 %v557, 0.01
      %v562 = vmax.f32 %v554, %v558
      %v563 = vmax.f32 %v555, %v559
      %v564 = vmax.f32 %v556, %v560
      %v565 = vmax.f32 %v557, %v561
      %s566 = scalar_lea.vmem %s234, 96
      %567 = vst [vmem:[%s566] sm:$0xff] %v562
      %568 = vst [vmem:[%s566 + $0x8] sm:$0xff] %v563
      %569 = vst [vmem:[%s566 + $0x10] sm:$0xff] %v564
      %570 = vst [vmem:[%s566 + $0x18] sm:$0xff] %v565
      %s571 = smul.u32 4, %s19
      %p572 = scmp.lt.s32.totalorder %s18, 1
      %s573 = scalar_select %p572, %s18, 1
      %p574 = scmp.lt.s32.totalorder %s571, 7
      %s575 = scalar_select %p574, %s571, 7
      %s576 = smul.addr %s575, 4
      %s577 = smul.addr %s573, 32
      %s578 = sadd.s32 %s576, %s577
      %s579 = smul.addr %s578, 8
      %s580 = scalar_lea.vmem %s3, %s579
      // Predicated region
      $region37: #{gin_gc_replay_block_3d.1} parent=31 // pred_check
        %p581 = pneg %p124
      $region38: #{gin_gc_replay_block_3d.1} parent=31 // pred_check_branch
        %583 = sbr.rel (%p581) target = $region40
      $region39: #{gin_gc_replay_block_3d.1} parent=31 // pred_region
        %s584 = smul.u32 4, %s19
      $region40: #{gin_gc_replay_block_3d.1} parent=31 // pred_fallthru
        _
    $region32: #{gin_gc_replay_block_3d.1} parent=5 // pred_fallthru
      _
    %p585 = scmp.le.s32.totalorder 2, %s9
    // Predicated region
    $region41: #{gin_gc_replay_block_3d.1} parent=5 // pred_check
      %p586 = pneg %p585
    $region42: #{gin_gc_replay_block_3d.1} parent=5 // pred_check_branch
      %588 = sbr.rel (%p586) target = $region44
    $region43: #{gin_gc_replay_block_3d.1} parent=5 // pred_region
      %s589 = ssub.s32 %s9, 2
      // Predicated region
      $region45: #{gin_gc_replay_block_3d.1} parent=43 // pred_check
        %p590 = pneg %p130
      $region46: #{gin_gc_replay_block_3d.1} parent=43 // pred_check_branch
        %592 = sbr.rel (%p590) target = $region48
      $region47: #{gin_gc_replay_block_3d.1} parent=43 // pred_region
        %s593 = smul.u32 4, %s21
        %p594 = scmp.lt.s32.totalorder %s20, 1
        %s595 = scalar_select %p594, %s20, 1
        %p596 = scmp.lt.s32.totalorder %s593, 7
        %s597 = scalar_select %p596, %s593, 7
        %s598 = smul.addr %s597, 4
        %s599 = smul.addr %s595, 32
        %s600 = sadd.s32 %s598, %s599
        %s601 = smul.addr %s600, 8
        %s602 = scalar_lea.vmem %s3, %s601
      $region48: #{gin_gc_replay_block_3d.1} parent=43 // pred_fallthru
        _
    $region44: #{gin_gc_replay_block_3d.1} parent=5 // pred_fallthru
      _
  $region6: #{gin_gc_replay_block_3d.1} parent=0 // loop_footer
    %s13 = sadd.s32 1, %s9
  $region7: #{gin_gc_replay_block_3d.1} parent=0 // loop_footer_branch
    %8 = sbr.rel target = $region3
  $region8: #{gin_gc_replay_block_3d.1} parent=0 // loop_exit
    _

</llo_original>
